<compile_context>
chip_gen: v7x
topology: tpu7x:2x2x1
jax: 0.10.0
libtpu: 0.0.40
codegen_flags: <defaults>
</compile_context>

<pallas_src>
import math

import jax
import jax.numpy as jnp
from jax.experimental import pallas as pl
from jax.experimental.pallas import tpu as pltpu


# ---------------------------------------------------------------------------
# Positional encoding: reproduces PositionalEncoding.pe[:, :max_len, :] exactly.
# ---------------------------------------------------------------------------
def make_positional_encoding(d_model: int, max_len: int) -> jnp.ndarray:
    d_use = d_model if d_model % 2 == 0 else d_model + 1
    position = jnp.arange(0, max_len, dtype=jnp.float32)[:, None]            # (L, 1)
    div_term = jnp.exp(
        jnp.arange(0, d_use, 2, dtype=jnp.float32) * (-math.log(10000.0) / d_model)
    )
    pe = jnp.zeros((max_len, d_use), dtype=jnp.float32)
    pe = pe.at[:, 0::2].set(jnp.sin(position * div_term))
    pe = pe.at[:, 1::2].set(jnp.cos(position * div_term))
    return pe[:, :d_model] * 0.05                                            # (L, d_model)


# ---------------------------------------------------------------------------
# Hardware queries (conservative fallbacks so the script always runs).
# ---------------------------------------------------------------------------
def _vmem_capacity_bytes() -> int:
    try:
        return int(pltpu.get_tpu_info().vmem_capacity_bytes)
    except Exception:
        return 64 * 1024 * 1024        # v7x per-TensorCore VMEM (smallest of v5e/v6e/v7x)


def _num_tensorcores() -> int:
    try:
        kind = jax.devices()[0].device_kind.lower()
        if "v7" in kind or "7x" in kind:
            return 2                   # v7x: 2 TensorCores per chip
    except Exception:
        pass
    return 1                           # v5e / v6e: single TensorCore


# ---------------------------------------------------------------------------
# One-time parameter preparation: fold PE into fc1 bias, cast weights.
# ---------------------------------------------------------------------------
def fold_params(pe, w1, b1, w2, b2, compute_dtype=jnp.float32):
    """Fold the positional-encoding add into the fc1 bias (exact up to f32
    associativity) and cast the matmul operands to `compute_dtype`.
    Biases stay float32; accumulation in the kernel is always float32."""
    f_in = pe.shape[0] * pe.shape[1]
    pe_flat = pe.reshape(1, f_in).astype(jnp.float32)
    b1_eff = pe_flat @ w1.astype(jnp.float32) + b1.astype(jnp.float32)       # (1, H)
    return (
        w1.astype(compute_dtype),
        b1_eff.astype(jnp.float32),
        w2.astype(compute_dtype),
        b2.astype(jnp.float32),
    )


# ---------------------------------------------------------------------------
# Kernel
# ---------------------------------------------------------------------------
def encoder_kernel(x_ref, w1_ref, b1_ref, w2_ref, b2_ref, o_ref):
    # x_ref : (TB, F_in)   streamed batch tile (f32 or bf16)
    # w1_ref: (F_in, H)    resident (PE already folded into b1)
    # b1_ref: (1, H) f32   resident
    # w2_ref: (H, H)       resident
    # b2_ref: (1, H) f32   resident
    # o_ref : (TB, H) f32  compact output tile (no hidden-dim padding)
    h1 = jnp.dot(x_ref[...], w1_ref[...], preferred_element_type=jnp.float32)
    h1 = jnp.maximum(h1 + b1_ref[...], 0.0)                                  # ReLU
    h2 = jnp.dot(h1.astype(w2_ref.dtype), w2_ref[...],
                 preferred_element_type=jnp.float32)
    h2 = jnp.maximum(h2 + b2_ref[...], 0.0)                                  # ReLU
    o_ref[...] = h2.astype(o_ref.dtype)


# ---------------------------------------------------------------------------
# Batch-tile sizing from an explicit VMEM budget.
# ---------------------------------------------------------------------------
def _choose_block_b(B, F_in, H, itemsize, vmem_cap, num_tc):
    row_bytes = itemsize * F_in + 4 * H                    # x row + out row
    # Pallas double-buffers every input, including constant-index weights: 2x.
    weight_bytes2 = 2 * (itemsize * (F_in * H + H * H) + 4 * 2 * H)
    budget = int(vmem_cap * 0.75) - weight_bytes2 - (4 << 20)   # compiler headroom
    if budget <= 0:
        return 8, weight_bytes2        # weights nearly fill VMEM; minimal tiles
    max_rows = budget // (2 * row_bytes)                   # double-buffered tiles
    block_b = min(max_rows, 8192)                          # diminishing returns past ~8K
    if num_tc >= 2 and B > 8:
        # v7x: ensure >= 2 batch tiles so both TensorCores get work.
        block_b = min(block_b, pl.cdiv(pl.cdiv(B, 2), 8) * 8)
    block_b = min(block_b, pl.cdiv(B, 8) * 8)              # never exceed (8-rounded) B
    if block_b >= 256:
        block_b = (block_b // 256) * 256                   # MXU M-granularity
    else:
        block_b = max(8, (block_b // 8) * 8)
    return block_b, weight_bytes2


# ---------------------------------------------------------------------------
# Forward wrapper
# ---------------------------------------------------------------------------
def encoder_forward(x, w1, b1, w2, b2, *, block_b=None):
    """x: (B, max_len, d_model) -> (B, hidden_dim) float32.
    w1/b1/w2/b2 are the *folded* params from fold_params()."""
    B, L, D = x.shape
    F_in = L * D
    H = w1.shape[1]
    compute_dtype = w1.dtype
    itemsize = jnp.dtype(compute_dtype).itemsize

    vmem_cap = _vmem_capacity_bytes()
    num_tc = _num_tensorcores()
    auto_block_b, weight_bytes2 = _choose_block_b(B, F_in, H, itemsize, vmem_cap, num_tc)
    if block_b is None:
        block_b = auto_block_b

    # Explicit VMEM limit sized from the real buffers (+ headroom), never above
    # the physical per-core capacity.
    tile_bytes2 = 2 * block_b * (itemsize * F_in + 4 * H)
    vmem_limit = int(min(vmem_cap - (4 << 20),
                         max(weight_bytes2 + tile_bytes2 + (8 << 20), 32 << 20)))

    # Row-major flatten (same as torch .reshape); no batch padding — Pallas
    # handles the ragged last tile, OOB output rows are simply not written.
    x_flat = x.reshape(B, F_in).astype(compute_dtype)

    grid = (pl.cdiv(B, block_b),)

    cost = pl.CostEstimate(
        flops=2 * B * F_in * H + 2 * B * H * H,
        transcendentals=0,
        bytes_accessed=itemsize * (B * F_in + F_in * H + H * H)
        + 4 * 2 * H + 4 * B * H,
    )

    out = pl.pallas_call(
        encoder_kernel,
        out_shape=jax.ShapeDtypeStruct((B, H), jnp.float32),
        grid_spec=pl.GridSpec(
            grid=grid,
            in_specs=[
                pl.BlockSpec((block_b, F_in), lambda i: (i, 0)),   # x: streamed per tile
                pl.BlockSpec((F_in, H), lambda i: (0, 0)),         # w1: resident
                pl.BlockSpec((1, H), lambda i: (0, 0)),            # b1 (+PE): resident
                pl.BlockSpec((H, H), lambda i: (0, 0)),            # w2: resident
                pl.BlockSpec((1, H), lambda i: (0, 0)),            # b2: resident
            ],
            out_specs=pl.BlockSpec((block_b, H), lambda i: (i, 0)),
        ),
        compiler_params=pltpu.CompilerParams(
            dimension_semantics=("parallel",),                     # shard batch tiles across TCs
            vmem_limit_bytes=vmem_limit,
        ),
        cost_estimate=cost,
    )(x_flat, w1, b1, w2, b2)

    return out


# ---------------------------------------------------------------------------
# Deterministic Linear-style init (uniform +/- 1/sqrt(fan_in)), weights (in, out).
# ---------------------------------------------------------------------------
def init_params(key, d_model=3, hidden_dim=32, max_len=32):
    f_in1 = d_model * max_len
    k1, k2, k3, k4 = jax.random.split(key, 4)
    lim1 = 1.0 / math.sqrt(f_in1)
    lim2 = 1.0 / math.sqrt(hidden_dim)
    w1 = jax.random.uniform(k1, (f_in1, hidden_dim), jnp.float32, -lim1, lim1)
    b1 = jax.random.uniform(k2, (1, hidden_dim), jnp.float32, -lim1, lim1)
    w2 = jax.random.uniform(k3, (hidden_dim, hidden_dim), jnp.float32, -lim2, lim2)
    b2 = jax.random.uniform(k4, (1, hidden_dim), jnp.float32, -lim2, lim2)
    return w1, b1, w2, b2


if __name__ == "__main__":
    d_model, hidden_dim, max_len = 3, 32, 32
    batch = 2

    key = jax.random.PRNGKey(0)
    kx, kp = jax.random.split(key)

    # Example "processed" input: (batch, max_len, d_model), as Encoder.forward expects.
    x = jax.random.normal(kx, (batch, max_len, d_model), dtype=jnp.float32)

    pe = make_positional_encoding(d_model, max_len)          # (max_len, d_model)
    w1, b1, w2, b2 = init_params(kp, d_model, hidden_dim, max_len)

    # One-time param prep (PE folded into fc1 bias), kept out of the forward path.
    # (Use compute_dtype=jnp.bfloat16 for the bf16-MXU fast path; relax tolerance.)
    folded = fold_params(pe, w1, b1, w2, b2, compute_dtype=jnp.float32)

    fwd = jax.jit(encoder_forward)
    out = jax.block_until_ready(fwd(x, *folded))

    # Pure-JAX reference of the same forward (PE fold only changes f32 associativity).
    ref = jnp.maximum(
        jnp.maximum((x + pe[None]).reshape(batch, -1) @ w1 + b1, 0.0) @ w2 + b2, 0.0
    )
    assert out.shape == (batch, hidden_dim)
    assert jnp.allclose(out, ref, atol=2e-5, rtol=2e-5)

    print("KERNEL_OK")
</pallas_src>

<mosaic_0001>
module attributes {stable_mosaic.version = 11 : i64} {
  func.func @encoder_kernel(%arg0: i32, %arg1: memref<8x96xf32, #tpu.memory_space<vmem>>, %arg2: memref<96x32xf32, #tpu.memory_space<vmem>>, %arg3: memref<1x32xf32, #tpu.memory_space<vmem>>, %arg4: memref<32x32xf32, #tpu.memory_space<vmem>>, %arg5: memref<1x32xf32, #tpu.memory_space<vmem>>, %arg6: memref<8x32xf32, #tpu.memory_space<vmem>>) attributes {dimension_semantics = [#tpu.dimension_semantics<parallel>], iteration_bounds = array<i64: 1>, scalar_prefetch = 0 : i64, scratch_operands = 0 : i64, tpu.core_type = #tpu.core_type<tc>, window_params = [{transform_indices = @transform_0, window_bounds = array<i64: 8, 96>}, {pipeline_mode = #tpu.pipeline_mode<synchronous>, transform_indices = @transform_1, window_bounds = array<i64: 96, 32>}, {pipeline_mode = #tpu.pipeline_mode<synchronous>, transform_indices = @transform_2, window_bounds = array<i64: 1, 32>}, {pipeline_mode = #tpu.pipeline_mode<synchronous>, transform_indices = @transform_3, window_bounds = array<i64: 32, 32>}, {pipeline_mode = #tpu.pipeline_mode<synchronous>, transform_indices = @transform_4, window_bounds = array<i64: 1, 32>}, {transform_indices = @transform_5, window_bounds = array<i64: 8, 32>}]} {
    %c0 = arith.constant 0 : index
    %c0_0 = arith.constant 0 : index
    %0 = vector.load %arg1[%c0, %c0_0] : memref<8x96xf32, #tpu.memory_space<vmem>>, vector<8x96xf32>
    %c0_1 = arith.constant 0 : index
    %c0_2 = arith.constant 0 : index
    %1 = vector.load %arg2[%c0_1, %c0_2] : memref<96x32xf32, #tpu.memory_space<vmem>>, vector<96x32xf32>
    %cst = arith.constant dense<0.000000e+00> : vector<8x32xf32>
    %2 = tpu.matmul %0, %1, %cst {dimension_numbers = #tpu.dot_dimension_numbers<[1], [0], [0], [1], [0, 0, 1, 1], [], []>} : vector<8x96xf32>, vector<96x32xf32>, vector<8x32xf32> -> vector<8x32xf32>
    %c0_3 = arith.constant 0 : index
    %c0_4 = arith.constant 0 : index
    %3 = vector.load %arg3[%c0_3, %c0_4] : memref<1x32xf32, #tpu.memory_space<vmem>>, vector<1x32xf32>
    %4 = vector.broadcast %3 : vector<1x32xf32> to vector<8x32xf32>
    %5 = arith.addf %2, %4 : vector<8x32xf32>
    %cst_5 = arith.constant 0.000000e+00 : f32
    %6 = vector.broadcast %cst_5 : f32 to vector<8x32xf32>
    %7 = arith.maximumf %5, %6 : vector<8x32xf32>
    %c0_6 = arith.constant 0 : index
    %c0_7 = arith.constant 0 : index
    %8 = vector.load %arg4[%c0_6, %c0_7] : memref<32x32xf32, #tpu.memory_space<vmem>>, vector<32x32xf32>
    %cst_8 = arith.constant dense<0.000000e+00> : vector<8x32xf32>
    %9 = tpu.matmul %7, %8, %cst_8 {dimension_numbers = #tpu.dot_dimension_numbers<[1], [0], [0], [1], [0, 0, 1, 1], [], []>} : vector<8x32xf32>, vector<32x32xf32>, vector<8x32xf32> -> vector<8x32xf32>
    %c0_9 = arith.constant 0 : index
    %c0_10 = arith.constant 0 : index
    %10 = vector.load %arg5[%c0_9, %c0_10] : memref<1x32xf32, #tpu.memory_space<vmem>>, vector<1x32xf32>
    %11 = vector.broadcast %10 : vector<1x32xf32> to vector<8x32xf32>
    %12 = arith.addf %9, %11 : vector<8x32xf32>
    %cst_11 = arith.constant 0.000000e+00 : f32
    %13 = vector.broadcast %cst_11 : f32 to vector<8x32xf32>
    %14 = arith.maximumf %12, %13 : vector<8x32xf32>
    %c0_12 = arith.constant 0 : index
    %c0_13 = arith.constant 0 : index
    %15 = vector.load %arg6[%c0_12, %c0_13] : memref<8x32xf32, #tpu.memory_space<vmem>>, vector<8x32xf32>
    tpu.vector_store %arg6[%c0_12, %c0_13], %14 {strides = array<i32>} : memref<8x32xf32, #tpu.memory_space<vmem>>, vector<8x32xf32>,
    return
  }
  func.func @transform_0(%arg0: i32) -> (i32, i32) {
    %c0_i32 = arith.constant 0 : i32
    %c0_i32_0 = arith.constant 0 : i32
    return %arg0, %c0_i32 : i32, i32
  }
  func.func @transform_1(%arg0: i32) -> (i32, i32) {
    %c0_i32 = arith.constant 0 : i32
    %c0_i32_0 = arith.constant 0 : i32
    %c0_i32_1 = arith.constant 0 : i32
    return %c0_i32, %c0_i32_0 : i32, i32
  }
  func.func @transform_2(%arg0: i32) -> (i32, i32) {
    %c0_i32 = arith.constant 0 : i32
    %c0_i32_0 = arith.constant 0 : i32
    %c0_i32_1 = arith.constant 0 : i32
    return %c0_i32, %c0_i32_0 : i32, i32
  }
  func.func @transform_3(%arg0: i32) -> (i32, i32) {
    %c0_i32 = arith.constant 0 : i32
    %c0_i32_0 = arith.constant 0 : i32
    %c0_i32_1 = arith.constant 0 : i32
    return %c0_i32, %c0_i32_0 : i32, i32
  }
  func.func @transform_4(%arg0: i32) -> (i32, i32) {
    %c0_i32 = arith.constant 0 : i32
    %c0_i32_0 = arith.constant 0 : i32
    %c0_i32_1 = arith.constant 0 : i32
    return %c0_i32, %c0_i32_0 : i32, i32
  }
  func.func @transform_5(%arg0: i32) -> (i32, i32) {
    %c0_i32 = arith.constant 0 : i32
    %c0_i32_0 = arith.constant 0 : i32
    return %arg0, %c0_i32 : i32, i32
  }
}

</mosaic_0001>

<llo_original>
// kernel: encoder_forward.1
$region0: #{encoder_forward.1}
  #allocation0 [shape = 'u32[]', space=smem, size = 0x4, offset = 0x4, fixed_abs, tag = 'smem constant byte address 0x4 - core index']
  #allocation1 [shape = 'u32[144,128]{1,0:T(1,128)}', space=vmem, size = 0x12000, scoped, tag = 'internal scratch']
  %s0 = inlined_call_operand.vmem [shape: f32[2,96], index: 0, kind: input, shape index: {}]
  %s1 = inlined_call_operand.vmem [shape: f32[96,32], index: 1, kind: input, shape index: {}]
  %s2 = inlined_call_operand.vmem [shape: f32[1,32], index: 2, kind: input, shape index: {}]
  %s3 = inlined_call_operand.vmem [shape: f32[32,32], index: 3, kind: input, shape index: {}]
  %s4 = inlined_call_operand.vmem [shape: f32[1,32], index: 4, kind: input, shape index: {}]
  %s5 = inlined_call_operand.hbm [shape: f32[2,32], index: 5, kind: output, shape index: {}]
  %s6 = sld [smem:[#allocation0]]
  $region30: #{encoder_forward.1} parent=0
    _
  %s8 = ssub.s32 1, %s6
  %s9 = scalar_select 0, %s8, %s6
  $region1: #{encoder_forward.1} parent=0
    #allocation2 [shape = 'u8[4096]{0}', space=vmem, size = 0x1000, scoped, tag = 'output window, operand 0, single buffered']
    #allocation3 [shape = 's32[1]{0}', space=sflag, size = 0x4, scoped, tag = 'scoped memory for encoder_forward.1']
    %10 = vsyncpa [#allocation3], 0
    // Predicated region
    $region2: #{encoder_forward.1} parent=1 // pred_check
      _
    $region3: #{encoder_forward.1} parent=1 // pred_check_branch
      %12 = sbr.rel (0) target = $region5
    $region4: #{encoder_forward.1} parent=1 // pred_region
      _
    $region5: #{encoder_forward.1} parent=1 // pred_fallthru
      _
    // Predicated region
    $region6: #{encoder_forward.1} parent=1 // pred_check
      _
    $region7: #{encoder_forward.1} parent=1 // pred_check_branch
      %14 = sbr.rel (0) target = $region9
    $region8: #{encoder_forward.1} parent=1 // pred_region
      _
    $region9: #{encoder_forward.1} parent=1 // pred_fallthru
      _
    // Predicated region
    $region10: #{encoder_forward.1} parent=1 // pred_check
      _
    $region11: #{encoder_forward.1} parent=1 // pred_check_branch
      %16 = sbr.rel (0) target = $region13
    $region12: #{encoder_forward.1} parent=1 // pred_region
      _
    $region13: #{encoder_forward.1} parent=1 // pred_fallthru
      _
    // Predicated region
    $region14: #{encoder_forward.1} parent=1 // pred_check
      _
    $region15: #{encoder_forward.1} parent=1 // pred_check_branch
      %18 = sbr.rel (0) target = $region17
    $region16: #{encoder_forward.1} parent=1 // pred_region
      _
    $region17: #{encoder_forward.1} parent=1 // pred_fallthru
      _
    // Predicated region
    $region18: #{encoder_forward.1} parent=1 // pred_check
      _
    $region19: #{encoder_forward.1} parent=1 // pred_check_branch
      %20 = sbr.rel (0) target = $region21
    $region20: #{encoder_forward.1} parent=1 // pred_region
      _
    $region21: #{encoder_forward.1} parent=1 // pred_fallthru
      _
    %v21 = vld [vmem:[%s0] sm:$0xff]
    %v22 = vld [vmem:[%s1] sm:$0xff]
    %v23 = vld [vmem:[%s1 + $0x8] sm:$0xff]
    %v24 = vld [vmem:[%s1 + $0x10] sm:$0xff]
    %v25 = vld [vmem:[%s1 + $0x18] sm:$0xff]
    %v26 = vld [vmem:[%s1 + $0x20] sm:$0xff]
    %v27 = vld [vmem:[%s1 + $0x28] sm:$0xff]
    %v28 = vld [vmem:[%s1 + $0x30] sm:$0xff]
    %v29 = vld [vmem:[%s1 + $0x38] sm:$0xff]
    %v30 = vld [vmem:[%s1 + $0x40] sm:$0xff]
    %v31 = vld [vmem:[%s1 + $0x48] sm:$0xff]
    %v32 = vld [vmem:[%s1 + $0x50] sm:$0xff]
    %v33 = vld [vmem:[%s1 + $0x58] sm:$0xff]
    %v34 = vld [vmem:[%s2] sm:$0x1]
    %v36 = vlaneseq
    %v37 = vshrl.u32 %v36, 7
    %v38 = vsub.s32 0, %v37
    %v39 = vrot.slane %v34, %v38
    %vm41 = vcmask 785408
    %v43 = vsel %vm41, %v21, 0
    %45 = vmatprep.subr.mxu0 0.0
    %46 = vmatpush1.msra.mxu0 %v22
    %47 = vmatprep.subr.mxu0 0.0
    %48 = vmatpush1.msra.mxu0 %v23
    %49 = vmatprep.subr.mxu0 0.0
    %50 = vmatpush1.msra.mxu0 %v24
    %51 = vmatprep.subr.mxu0 0.0
    %52 = vmatpush1.msra.mxu0 %v25
    %53 = vmatprep.subr.mxu0 0.0
    %54 = vmatpush1.msra.mxu0 %v26
    %55 = vmatprep.subr.mxu0 0.0
    %56 = vmatpush1.msra.mxu0 %v27
    %57 = vmatprep.subr.mxu0 0.0
    %58 = vmatpush1.msra.mxu0 %v28
    %59 = vmatprep.subr.mxu0 0.0
    %60 = vmatpush1.msra.mxu0 %v29
    %61 = vmatprep.subr.mxu0 0.0
    %62 = vmatpush1.msra.mxu0 %v30
    %63 = vmatprep.subr.mxu0 0.0
    %64 = vmatpush1.msra.mxu0 %v31
    %65 = vmatprep.subr.mxu0 0.0
    %66 = vmatpush1.msra.mxu0 %v32
    %67 = vmatprep.subr.mxu0 0.0
    %68 = vmatpush1.msra.mxu0 %v33
    %69 = vmatprep.subr.mxu0 0.0
    %70 = vmatpush1.msra.mxu0 0.0
    %71 = vmatprep.subr.mxu0 0.0
    %72 = vmatpush1.msra.mxu0 0.0
    %73 = vmatprep.subr.mxu0 0.0
    %74 = vmatpush1.msra.mxu0 0.0
    %75 = vmatprep.subr.mxu0 0.0
    %76 = vmatpush1.msra.mxu0 0.0
    %77 = vmatprep.subr.mxu0 0.0
    %78 = vmatpush1.msra.mxu0 0.0
    %79 = vmatprep.subr.mxu0 0.0
    %80 = vmatpush1.msra.mxu0 0.0
    %81 = vmatprep.subr.mxu0 0.0
    %82 = vmatpush1.msra.mxu0 0.0
    %83 = vmatprep.subr.mxu0 0.0
    %84 = vmatpush1.msra.mxu0 0.0
    %85 = vmatprep.subr.mxu0 0.0
    %86 = vmatpush1.msra.mxu0 0.0
    %87 = vmatprep.subr.mxu0 0.0
    %88 = vmatpush1.msra.mxu0 0.0
    %89 = vmatprep.subr.mxu0 0.0
    %90 = vmatpush1.msra.mxu0 0.0
    %91 = vmatprep.subr.mxu0 0.0
    %92 = vmatpush1.msra.mxu0 0.0
    %93 = vmatprep.subr.mxu0 0.0
    %94 = vmatpush1.msra.mxu0 0.0
    %95 = vmatprep.subr.mxu0 0.0
    %96 = vmatpush1.msra.mxu0 0.0
    %97 = vmatprep.subr.mxu0 0.0
    %98 = vmatpush1.msra.mxu0 0.0
    %99 = vmatprep.subr.mxu0 0.0
    %100 = vmatpush1.msra.mxu0 0.0
    %101 = vmatprep.subr.mxu0 0.0
    %102 = vmatpush1.msra.mxu0 0.0
    %103 = vmatprep.subr.mxu0 0.0
    %104 = vmatpush1.msra.mxu0 0.0
    %105 = vmatprep.subr.mxu0 0.0
    %106 = vmatpush1.msra.mxu0 0.0
    %107 = vmatprep.subr.mxu0 0.0
    %108 = vmatpush1.msra.mxu0 0.0
    %109 = vmatprep.mubr.f32.mxu0 0.0
    %110 = vmatmul.mubr.f32.gmra.mrb[0].mxu0 %v43
    %v111 = vpop.f32.mrb[0].mxu0
    %v112 = vadd.f32 %v39, %v111
    %v113 = vpop.f32.mrb[0].mxu0
    %114 = vdwg.mxu0
    %v115 = vmax.f32 %v112, 0.0
    %v116 = vld [vmem:[%s3] sm:$0xff]
    %v117 = vld [vmem:[%s3 + $0x8] sm:$0xff]
    %v118 = vld [vmem:[%s3 + $0x10] sm:$0xff]
    %v119 = vld [vmem:[%s3 + $0x18] sm:$0xff]
    %v120 = vld [vmem:[%s4] sm:$0x1]
    %v122 = vlaneseq
    %v123 = vshrl.u32 %v122, 7
    %v124 = vsub.s32 0, %v123
    %v125 = vrot.slane %v120, %v124
    %vm127 = vcmask 261120
    %v129 = vsel %vm127, %v115, 0
    %131 = vmatprep.subr.mxu0 0.0
    %132 = vmatpush1.msra.mxu0 %v116
    %133 = vmatprep.subr.mxu0 0.0
    %134 = vmatpush1.msra.mxu0 %v117
    %135 = vmatprep.subr.mxu0 0.0
    %136 = vmatpush1.msra.mxu0 %v118
    %137 = vmatprep.subr.mxu0 0.0
    %138 = vmatpush1.msra.mxu0 %v119
    %139 = vmatprep.subr.mxu0 0.0
    %140 = vmatpush1.msra.mxu0 0.0
    %141 = vmatprep.subr.mxu0 0.0
    %142 = vmatpush1.msra.mxu0 0.0
    %143 = vmatprep.subr.mxu0 0.0
    %144 = vmatpush1.msra.mxu0 0.0
    %145 = vmatprep.subr.mxu0 0.0
    %146 = vmatpush1.msra.mxu0 0.0
    %147 = vmatprep.subr.mxu0 0.0
    %148 = vmatpush1.msra.mxu0 0.0
    %149 = vmatprep.subr.mxu0 0.0
    %150 = vmatpush1.msra.mxu0 0.0
    %151 = vmatprep.subr.mxu0 0.0
    %152 = vmatpush1.msra.mxu0 0.0
    %153 = vmatprep.subr.mxu0 0.0
    %154 = vmatpush1.msra.mxu0 0.0
    %155 = vmatprep.subr.mxu0 0.0
    %156 = vmatpush1.msra.mxu0 0.0
    %157 = vmatprep.subr.mxu0 0.0
    %158 = vmatpush1.msra.mxu0 0.0
    %159 = vmatprep.subr.mxu0 0.0
    %160 = vmatpush1.msra.mxu0 0.0
    %161 = vmatprep.subr.mxu0 0.0
    %162 = vmatpush1.msra.mxu0 0.0
    %163 = vmatprep.subr.mxu0 0.0
    %164 = vmatpush1.msra.mxu0 0.0
    %165 = vmatprep.subr.mxu0 0.0
    %166 = vmatpush1.msra.mxu0 0.0
    %167 = vmatprep.subr.mxu0 0.0
    %168 = vmatpush1.msra.mxu0 0.0
    %169 = vmatprep.subr.mxu0 0.0
    %170 = vmatpush1.msra.mxu0 0.0
    %171 = vmatprep.subr.mxu0 0.0
    %172 = vmatpush1.msra.mxu0 0.0
    %173 = vmatprep.subr.mxu0 0.0
    %174 = vmatpush1.msra.mxu0 0.0
    %175 = vmatprep.subr.mxu0 0.0
    %176 = vmatpush1.msra.mxu0 0.0
    %177 = vmatprep.subr.mxu0 0.0
    %178 = vmatpush1.msra.mxu0 0.0
    %179 = vmatprep.subr.mxu0 0.0
    %180 = vmatpush1.msra.mxu0 0.0
    %181 = vmatprep.subr.mxu0 0.0
    %182 = vmatpush1.msra.mxu0 0.0
    %183 = vmatprep.subr.mxu0 0.0
    %184 = vmatpush1.msra.mxu0 0.0
    %185 = vmatprep.subr.mxu0 0.0
    %186 = vmatpush1.msra.mxu0 0.0
    %187 = vmatprep.subr.mxu0 0.0
    %188 = vmatpush1.msra.mxu0 0.0
    %189 = vmatprep.subr.mxu0 0.0
    %190 = vmatpush1.msra.mxu0 0.0
    %191 = vmatprep.subr.mxu0 0.0
    %192 = vmatpush1.msra.mxu0 0.0
    %193 = vmatprep.subr.mxu0 0.0
    %194 = vmatpush1.msra.mxu0 0.0
    %195 = vmatprep.mubr.f32.mxu0 0.0
    %196 = vmatmul.mubr.f32.gmra.mrb[0].mxu0 %v129
    %v197 = vpop.f32.mrb[0].mxu0
    %v198 = vadd.f32 %v125, %v197
    %v199 = vpop.f32.mrb[0].mxu0
    %200 = vdwg.mxu0
    %v201 = vmax.f32 %v198, 0.0
    %202 = vst.msk [vmem:[#allocation2] sm:$0xff] %vm127, %v201
    // Predicated region
    $region22: #{encoder_forward.1} parent=1 // pred_check
      _
    $region23: #{encoder_forward.1} parent=1 // pred_check_branch
      %204 = sbr.rel (0) target = $region25
    $region24: #{encoder_forward.1} parent=1 // pred_region
      %s206 = ssub.s32 128, 32
      %207 = vsyncadd [#allocation3], %s206
      %s208 = sshll.u32 [#allocation2], 4
      %s209 = int_to_ptr.vmem [resolvable:$true] %s208
      %214 = dma.vmem_to_hbm [thread:$0]  %s209, 32, %s5, [#allocation3], 32, 32, 2
    $region25: #{encoder_forward.1} parent=1 // pred_fallthru
      _
    // Predicated region
    $region26: #{encoder_forward.1} parent=1 // pred_check
      _
    $region27: #{encoder_forward.1} parent=1 // pred_check_branch
      %216 = sbr.rel (0) target = $region29
    $region28: #{encoder_forward.1} parent=1 // pred_region
      %217 = dma.done [#allocation3], 128
    $region29: #{encoder_forward.1} parent=1 // pred_fallthru
      _
    %218 = vsyncpa [#allocation3], 1

</llo_original>
